<compile_context>
chip_gen: v5e
topology: v5e:2x2
jax: 0.10.0
libtpu: 0.0.40
codegen_flags: <defaults>
</compile_context>

<pallas_src>
import functools

import jax
import jax.numpy as jnp
from jax.experimental import pallas as pl
from jax.experimental.pallas import tpu as pltpu


def _round_up(v, m):
    return (v + m - 1) // m * m


def _mlp_kernel(x_ref, w1_ref, b1_ref, w2_ref, b2_ref, w3_ref, b3_ref, o_ref):
    """Fused 3-layer MLP on one (bb, Din) batch tile.

    x arrives f32 and is cast to bf16 here (no separate HBM cast pass);
    matmuls accumulate in f32 on the MXU; bias+ReLU epilogue in f32 on the
    VPU; inter-layer activations live as bf16.
    """
    x = x_ref[...].astype(jnp.bfloat16)
    h = jnp.dot(x, w1_ref[...], preferred_element_type=jnp.float32)
    h = jnp.maximum(h + b1_ref[...], 0.0).astype(jnp.bfloat16)     # ReLU

    h = jnp.dot(h, w2_ref[...], preferred_element_type=jnp.float32)
    h = jnp.maximum(h + b2_ref[...], 0.0).astype(jnp.bfloat16)     # ReLU

    o = jnp.dot(h, w3_ref[...], preferred_element_type=jnp.float32) + b3_ref[...]
    o_ref[...] = o.astype(o_ref.dtype)


def prepare_mlp_params(w1, b1, w2, b2, w3, b3):
    """Pad hidden dims to 128 lanes and cast weights to bf16.

    Call ONCE at model init; the results are reused by every mlp_forward call.
    Zero-padded weight rows/cols and zero bias entries are mathematically
    inert. The first-layer K dim (Din) and last-layer N dim (Dout) are left
    unpadded so x / the output need no padding at all.
    """
    LANE = 128
    Din, H1 = w1.shape
    H2, Dout = w3.shape
    H1_p, H2_p = _round_up(H1, LANE), _round_up(H2, LANE)

    def pad2(a, r, c, dtype):
        a = a.astype(dtype)
        return jnp.pad(a, ((0, r - a.shape[0]), (0, c - a.shape[1])))

    w1_p = pad2(w1, Din, H1_p, jnp.bfloat16)
    w2_p = pad2(w2, H1_p, H2_p, jnp.bfloat16)
    w3_p = pad2(w3, H2_p, Dout, jnp.bfloat16)
    b1_p = pad2(b1.reshape(1, -1), 1, H1_p, jnp.float32)
    b2_p = pad2(b2.reshape(1, -1), 1, H2_p, jnp.float32)
    b3_p = b3.reshape(1, -1).astype(jnp.float32)
    return (w1_p, b1_p, w2_p, b2_p, w3_p, b3_p)


@functools.partial(jax.jit, static_argnames=("block_b",))
def mlp_forward(x, params, *, block_b=1024):
    """x: (B, Din) f32. params: output of prepare_mlp_params. Returns (B, Dout) f32."""
    w1_p, b1_p, w2_p, b2_p, w3_p, b3_p = params
    B, Din = x.shape
    H1_p, H2_p, Dout = w1_p.shape[1], w2_p.shape[1], w3_p.shape[1]

    # Batch tile: split across (up to) two TensorCores, 8-sublane aligned,
    # capped at block_b. Pallas masks the partial last tile -> any B works.
    bb = min(block_b, max(8, _round_up(-(-B // 2), 8)))
    grid = (pl.cdiv(B, bb),)

    flops = 2 * B * (Din * H1_p + H1_p * H2_p + H2_p * Dout)
    bytes_accessed = (
        4 * x.size                                              # f32 x read
        + 2 * (w1_p.size + w2_p.size + w3_p.size)               # bf16 weights
        + 4 * (b1_p.size + b2_p.size + b3_p.size)               # f32 biases
        + 4 * B * Dout)                                         # f32 out

    full = lambda shape: pl.BlockSpec(shape, lambda i: (0, 0))

    return pl.pallas_call(
        _mlp_kernel,
        out_shape=jax.ShapeDtypeStruct((B, Dout), jnp.float32),
        grid_spec=pltpu.PrefetchScalarGridSpec(
            num_scalar_prefetch=0,
            grid=grid,
            in_specs=[
                pl.BlockSpec((bb, Din), lambda i: (i, 0)),      # x batch tile
                full(w1_p.shape), full(b1_p.shape),             # layer 0
                full(w2_p.shape), full(b2_p.shape),             # layer 1
                full(w3_p.shape), full(b3_p.shape),             # layer 2
            ],
            out_specs=pl.BlockSpec((bb, Dout), lambda i: (i, 0)),
        ),
        compiler_params=pltpu.CompilerParams(
            dimension_semantics=("parallel",),
        ),
        cost_estimate=pl.CostEstimate(
            flops=flops, transcendentals=0, bytes_accessed=bytes_accessed),
    )(x, w1_p, b1_p, w2_p, b2_p, w3_p, b3_p)


def _init_linear(key, fan_in, fan_out):
    """Deterministic init mimicking torch.nn.Linear (uniform +/- 1/sqrt(fan_in)).
    Weight returned as (fan_in, fan_out), i.e. already transposed for x @ W."""
    kw, kb = jax.random.split(key)
    bound = 1.0 / jnp.sqrt(jnp.float32(fan_in))
    w = jax.random.uniform(kw, (fan_in, fan_out), jnp.float32, -bound, bound)
    b = jax.random.uniform(kb, (1, fan_out), jnp.float32, -bound, bound)
    return w, b


if __name__ == "__main__":
    # MLP(input_dim=32, output_dim=16, hidden_size=(64, 48)); batch=512 so the
    # tile logic yields bb=256, grid=(2,) (both v7x TensorCores busy).
    batch, input_dim, output_dim = 512, 32, 16
    hidden_size = (64, 48)

    key = jax.random.PRNGKey(0)
    kx, k0, k1, k2 = jax.random.split(key, 4)

    dims = [input_dim, *hidden_size, output_dim]
    w1, b1 = _init_linear(k0, dims[0], dims[1])
    w2, b2 = _init_linear(k1, dims[1], dims[2])
    w3, b3 = _init_linear(k2, dims[2], dims[3])

    x = jax.random.normal(kx, (batch, input_dim), jnp.float32)

    # Pad/cast weights ONCE (model init), not per forward call.
    params = prepare_mlp_params(w1, b1, w2, b2, w3, b3)
    params = jax.block_until_ready(params)

    out = jax.block_until_ready(mlp_forward(x, params))
    assert out.shape == (batch, output_dim)

    # Reference using the same bf16-cast matmul inputs (mirrors kernel numerics).
    c = lambda a: a.astype(jnp.bfloat16).astype(jnp.float32)
    h = jnp.maximum(c(x) @ c(w1) + b1, 0.0)
    h = jnp.maximum(c(h) @ c(w2) + b2, 0.0)
    ref = c(h) @ c(w3) + b3
    assert jnp.allclose(out, ref, atol=1e-2, rtol=1e-2)

    # Full-f32 reference (PyTorch semantics) with bf16-input tolerance.
    h32 = jnp.maximum(x @ w1 + b1, 0.0)
    h32 = jnp.maximum(h32 @ w2 + b2, 0.0)
    ref32 = h32 @ w3 + b3
    assert jnp.allclose(out, ref32, atol=5e-2, rtol=5e-2)

    # Remainder handling: batch not divisible by 8 or the tile; grid stays 2.
    out2 = jax.block_until_ready(mlp_forward(x[:100], params))
    assert out2.shape == (100, output_dim)
    assert jnp.allclose(out2, ref[:100], atol=1e-2, rtol=1e-2)

    print("KERNEL_OK")
</pallas_src>

<mosaic_0001>
module attributes {stable_mosaic.version = 11 : i64} {
  func.func @_mlp_kernel(%arg0: i32, %arg1: memref<256x32xf32, #tpu.memory_space<vmem>>, %arg2: memref<32x128xbf16, #tpu.memory_space<vmem>>, %arg3: memref<1x128xf32, #tpu.memory_space<vmem>>, %arg4: memref<128x128xbf16, #tpu.memory_space<vmem>>, %arg5: memref<1x128xf32, #tpu.memory_space<vmem>>, %arg6: memref<128x16xbf16, #tpu.memory_space<vmem>>, %arg7: memref<1x16xf32, #tpu.memory_space<vmem>>, %arg8: memref<256x16xf32, #tpu.memory_space<vmem>>) attributes {dimension_semantics = [#tpu.dimension_semantics<parallel>], iteration_bounds = array<i64: 2>, scalar_prefetch = 0 : i64, scratch_operands = 0 : i64, tpu.core_type = #tpu.core_type<tc>, window_params = [{transform_indices = @transform_0, window_bounds = array<i64: 256, 32>}, {pipeline_mode = #tpu.pipeline_mode<synchronous>, transform_indices = @transform_1, window_bounds = array<i64: 32, 128>}, {pipeline_mode = #tpu.pipeline_mode<synchronous>, transform_indices = @transform_2, window_bounds = array<i64: 1, 128>}, {pipeline_mode = #tpu.pipeline_mode<synchronous>, transform_indices = @transform_3, window_bounds = array<i64: 128, 128>}, {pipeline_mode = #tpu.pipeline_mode<synchronous>, transform_indices = @transform_4, window_bounds = array<i64: 1, 128>}, {pipeline_mode = #tpu.pipeline_mode<synchronous>, transform_indices = @transform_5, window_bounds = array<i64: 128, 16>}, {pipeline_mode = #tpu.pipeline_mode<synchronous>, transform_indices = @transform_6, window_bounds = array<i64: 1, 16>}, {transform_indices = @transform_7, window_bounds = array<i64: 256, 16>}]} {
    %c0 = arith.constant 0 : index
    %c0_0 = arith.constant 0 : index
    %0 = vector.load %arg1[%c0, %c0_0] : memref<256x32xf32, #tpu.memory_space<vmem>>, vector<256x32xf32>
    %1 = arith.truncf %0 : vector<256x32xf32> to vector<256x32xbf16>
    %c0_1 = arith.constant 0 : index
    %c0_2 = arith.constant 0 : index
    %2 = vector.load %arg2[%c0_1, %c0_2] : memref<32x128xbf16, #tpu.memory_space<vmem>>, vector<32x128xbf16>
    %cst = arith.constant dense<0.000000e+00> : vector<256x128xf32>
    %3 = tpu.matmul %1, %2, %cst {dimension_numbers = #tpu.dot_dimension_numbers<[1], [0], [0], [1], [0, 0, 1, 1], [], []>} : vector<256x32xbf16>, vector<32x128xbf16>, vector<256x128xf32> -> vector<256x128xf32>
    %c0_3 = arith.constant 0 : index
    %c0_4 = arith.constant 0 : index
    %4 = vector.load %arg3[%c0_3, %c0_4] : memref<1x128xf32, #tpu.memory_space<vmem>>, vector<1x128xf32>
    %5 = vector.broadcast %4 : vector<1x128xf32> to vector<256x128xf32>
    %6 = arith.addf %3, %5 : vector<256x128xf32>
    %cst_5 = arith.constant 0.000000e+00 : f32
    %7 = vector.broadcast %cst_5 : f32 to vector<256x128xf32>
    %8 = arith.maximumf %6, %7 : vector<256x128xf32>
    %9 = arith.truncf %8 : vector<256x128xf32> to vector<256x128xbf16>
    %c0_6 = arith.constant 0 : index
    %c0_7 = arith.constant 0 : index
    %10 = vector.load %arg4[%c0_6, %c0_7] : memref<128x128xbf16, #tpu.memory_space<vmem>>, vector<128x128xbf16>
    %cst_8 = arith.constant dense<0.000000e+00> : vector<256x128xf32>
    %11 = tpu.matmul %9, %10, %cst_8 {dimension_numbers = #tpu.dot_dimension_numbers<[1], [0], [0], [1], [0, 0, 1, 1], [], []>} : vector<256x128xbf16>, vector<128x128xbf16>, vector<256x128xf32> -> vector<256x128xf32>
    %c0_9 = arith.constant 0 : index
    %c0_10 = arith.constant 0 : index
    %12 = vector.load %arg5[%c0_9, %c0_10] : memref<1x128xf32, #tpu.memory_space<vmem>>, vector<1x128xf32>
    %13 = vector.broadcast %12 : vector<1x128xf32> to vector<256x128xf32>
    %14 = arith.addf %11, %13 : vector<256x128xf32>
    %cst_11 = arith.constant 0.000000e+00 : f32
    %15 = vector.broadcast %cst_11 : f32 to vector<256x128xf32>
    %16 = arith.maximumf %14, %15 : vector<256x128xf32>
    %17 = arith.truncf %16 : vector<256x128xf32> to vector<256x128xbf16>
    %c0_12 = arith.constant 0 : index
    %c0_13 = arith.constant 0 : index
    %18 = vector.load %arg6[%c0_12, %c0_13] : memref<128x16xbf16, #tpu.memory_space<vmem>>, vector<128x16xbf16>
    %cst_14 = arith.constant dense<0.000000e+00> : vector<256x16xf32>
    %19 = tpu.matmul %17, %18, %cst_14 {dimension_numbers = #tpu.dot_dimension_numbers<[1], [0], [0], [1], [0, 0, 1, 1], [], []>} : vector<256x128xbf16>, vector<128x16xbf16>, vector<256x16xf32> -> vector<256x16xf32>
    %c0_15 = arith.constant 0 : index
    %c0_16 = arith.constant 0 : index
    %20 = vector.load %arg7[%c0_15, %c0_16] : memref<1x16xf32, #tpu.memory_space<vmem>>, vector<1x16xf32>
    %21 = vector.broadcast %20 : vector<1x16xf32> to vector<256x16xf32>
    %22 = arith.addf %19, %21 : vector<256x16xf32>
    %c0_17 = arith.constant 0 : index
    %c0_18 = arith.constant 0 : index
    %23 = vector.load %arg8[%c0_17, %c0_18] : memref<256x16xf32, #tpu.memory_space<vmem>>, vector<256x16xf32>
    tpu.vector_store %arg8[%c0_17, %c0_18], %22 {strides = array<i32>} : memref<256x16xf32, #tpu.memory_space<vmem>>, vector<256x16xf32>,
    return
  }
  func.func @transform_0(%arg0: i32) -> (i32, i32) {
    %c0_i32 = arith.constant 0 : i32
    %c0_i32_0 = arith.constant 0 : i32
    return %arg0, %c0_i32 : i32, i32
  }
  func.func @transform_1(%arg0: i32) -> (i32, i32) {
    %c0_i32 = arith.constant 0 : i32
    %c0_i32_0 = arith.constant 0 : i32
    %c0_i32_1 = arith.constant 0 : i32
    return %c0_i32, %c0_i32_0 : i32, i32
  }
  func.func @transform_2(%arg0: i32) -> (i32, i32) {
    %c0_i32 = arith.constant 0 : i32
    %c0_i32_0 = arith.constant 0 : i32
    %c0_i32_1 = arith.constant 0 : i32
    return %c0_i32, %c0_i32_0 : i32, i32
  }
  func.func @transform_3(%arg0: i32) -> (i32, i32) {
    %c0_i32 = arith.constant 0 : i32
    %c0_i32_0 = arith.constant 0 : i32
    %c0_i32_1 = arith.constant 0 : i32
    return %c0_i32, %c0_i32_0 : i32, i32
  }
  func.func @transform_4(%arg0: i32) -> (i32, i32) {
    %c0_i32 = arith.constant 0 : i32
    %c0_i32_0 = arith.constant 0 : i32
    %c0_i32_1 = arith.constant 0 : i32
    return %c0_i32, %c0_i32_0 : i32, i32
  }
  func.func @transform_5(%arg0: i32) -> (i32, i32) {
    %c0_i32 = arith.constant 0 : i32
    %c0_i32_0 = arith.constant 0 : i32
    %c0_i32_1 = arith.constant 0 : i32
    return %c0_i32, %c0_i32_0 : i32, i32
  }
  func.func @transform_6(%arg0: i32) -> (i32, i32) {
    %c0_i32 = arith.constant 0 : i32
    %c0_i32_0 = arith.constant 0 : i32
    %c0_i32_1 = arith.constant 0 : i32
    return %c0_i32, %c0_i32_0 : i32, i32
  }
  func.func @transform_7(%arg0: i32) -> (i32, i32) {
    %c0_i32 = arith.constant 0 : i32
    %c0_i32_0 = arith.constant 0 : i32
    return %arg0, %c0_i32 : i32, i32
  }
}

</mosaic_0001>

<llo_original>
// kernel: mlp_forward.1
$region0: #{mlp_forward.1}
  #allocation0 [shape = 'u32[]', space=smem, size = 0x4, offset = 0x4, fixed_abs, tag = 'smem constant byte address 0x4 - core index']
  #allocation1 [shape = 'u32[72,128]{1,0:T(1,128)}', space=vmem, size = 0x9000, scoped, tag = 'internal scratch']
  %s0 = inlined_call_operand.vmem [shape: f32[512,32], index: 0, kind: input, shape index: {}]
  %s1 = inlined_call_operand.vmem [shape: bf16[32,128], index: 1, kind: input, shape index: {}]
  %s2 = inlined_call_operand.vmem [shape: f32[1,128], index: 2, kind: input, shape index: {}]
  %s3 = inlined_call_operand.vmem [shape: bf16[128,128], index: 3, kind: input, shape index: {}]
  %s4 = inlined_call_operand.vmem [shape: f32[1,128], index: 4, kind: input, shape index: {}]
  %s5 = inlined_call_operand.vmem [shape: bf16[128,16], index: 5, kind: input, shape index: {}]
  %s6 = inlined_call_operand.vmem [shape: f32[1,16], index: 6, kind: input, shape index: {}]
  %s7 = inlined_call_operand.vmem [shape: f32[512,16], index: 7, kind: output, shape index: {}]
  %s8 = sld [smem:[#allocation0]]
  $region61: #{mlp_forward.1} parent=0
    _
  %s10 = ssub.s32 1, %s8
  %s11 = scalar_select 0, %s10, %s8
  loop: start=0, step=1, limit=4
  $region2: #{mlp_forward.1} parent=0 // loop_pre_header
    _
  $region3: #{mlp_forward.1} parent=0 // loop_header
    %s13 = sphi 0, %s17
    %p14 = scmp.ge.s32.totalorder %s13, 4
    %s23 = sphi 0, %s25
    %s26 = sphi 0, %s23
    %s27 = sphi 0, %s26
    %s43 = sphi 0, %s27
    %s47 = sphi 0, %s47
    %s49 = sphi 0, %s47
    %s50 = sphi 0, %s49
    %s64 = sphi 0, %s50
    %s68 = sphi 0, %s68
    %s70 = sphi 0, %s68
    %s71 = sphi 0, %s70
    %s85 = sphi 0, %s71
    %s89 = sphi 0, %s89
    %s91 = sphi 0, %s89
    %s92 = sphi 0, %s91
    %s106 = sphi 0, %s92
    %s110 = sphi 0, %s110
    %s112 = sphi 0, %s110
    %s113 = sphi 0, %s112
    %s127 = sphi 0, %s113
    %s131 = sphi 0, %s131
    %s133 = sphi 0, %s131
    %s134 = sphi 0, %s133
    %s148 = sphi 0, %s134
    %s152 = sphi 0, %s152
    %s154 = sphi 0, %s152
    %s155 = sphi 0, %s154
    %s169 = sphi 0, %s155
    %s175 = sphi 0, %s177
    %s178 = sphi 0, %s175
    %s179 = sphi 0, %s178
    %s195 = sphi 0, %s179
  $region4: #{mlp_forward.1} parent=0 // loop_header_branch
    %16 = sbr.rel (%p14) target = $region8
  $region5: #{mlp_forward.1} parent=0 // loop_body
    %s18 = ssub.s32 %s13, 1
    %s19 = ssub.s32 %s13, 2
    %s20 = sadd.s32 %s13, 1
    %s21 = ssub.s32 %s13, %s20
    %p22 = scmp.eq.s32.totalorder %s21, 0
    %s24 = sadd.s32 %s23, 1
    %s25 = scalar_select %p22, %s23, %s24
    %p28 = pneg %p22
    %p29 = scmp.eq.s32.totalorder %s13, 1
    %p30 = por %p28, %p29
    %p31 = scmp.ne.s32.totalorder %s23, %s26
    %p32 = scmp.eq.s32.totalorder %s13, 0
    %p33 = por %p31, %p32
    %p34 = scmp.ne.s32.totalorder %s23, %s26
    %p35 = scmp.eq.s32.totalorder %s18, 1
    %p36 = por %p34, %p35
    %p37 = scmp.ne.s32.totalorder %s26, %s27
    %p38 = scmp.eq.s32.totalorder %s18, 0
    %p39 = por %p37, %p38
    %p40 = scmp.ne.s32.totalorder %s26, %s27
    %p41 = scmp.eq.s32.totalorder %s19, 1
    %p42 = por %p40, %p41
    %p44 = scmp.ne.s32.totalorder %s27, %s43
    %p45 = scmp.eq.s32.totalorder %s19, 0
    %p46 = por %p44, %p45
    %s48 = sadd.s32 %s47, 1
    %p51 = scmp.eq.s32.totalorder %s13, 1
    %p52 = scmp.ne.s32.totalorder %s47, %s49
    %p53 = scmp.eq.s32.totalorder %s13, 0
    %p54 = por %p52, %p53
    %p55 = scmp.ne.s32.totalorder %s47, %s49
    %p56 = scmp.eq.s32.totalorder %s18, 1
    %p57 = por %p55, %p56
    %p58 = scmp.ne.s32.totalorder %s49, %s50
    %p59 = scmp.eq.s32.totalorder %s18, 0
    %p60 = por %p58, %p59
    %p61 = scmp.ne.s32.totalorder %s49, %s50
    %p62 = scmp.eq.s32.totalorder %s19, 1
    %p63 = por %p61, %p62
    %p65 = scmp.ne.s32.totalorder %s50, %s64
    %p66 = scmp.eq.s32.totalorder %s19, 0
    %p67 = por %p65, %p66
    %s69 = sadd.s32 %s68, 1
    %p72 = scmp.eq.s32.totalorder %s13, 1
    %p73 = scmp.ne.s32.totalorder %s68, %s70
    %p74 = scmp.eq.s32.totalorder %s13, 0
    %p75 = por %p73, %p74
    %p76 = scmp.ne.s32.totalorder %s68, %s70
    %p77 = scmp.eq.s32.totalorder %s18, 1
    %p78 = por %p76, %p77
    %p79 = scmp.ne.s32.totalorder %s70, %s71
    %p80 = scmp.eq.s32.totalorder %s18, 0
    %p81 = por %p79, %p80
    %p82 = scmp.ne.s32.totalorder %s70, %s71
    %p83 = scmp.eq.s32.totalorder %s19, 1
    %p84 = por %p82, %p83
    %p86 = scmp.ne.s32.totalorder %s71, %s85
    %p87 = scmp.eq.s32.totalorder %s19, 0
    %p88 = por %p86, %p87
    %s90 = sadd.s32 %s89, 1
    %p93 = scmp.eq.s32.totalorder %s13, 1
    %p94 = scmp.ne.s32.totalorder %s89, %s91
    %p95 = scmp.eq.s32.totalorder %s13, 0
    %p96 = por %p94, %p95
    %p97 = scmp.ne.s32.totalorder %s89, %s91
    %p98 = scmp.eq.s32.totalorder %s18, 1
    %p99 = por %p97, %p98
    %p100 = scmp.ne.s32.totalorder %s91, %s92
    %p101 = scmp.eq.s32.totalorder %s18, 0
    %p102 = por %p100, %p101
    %p103 = scmp.ne.s32.totalorder %s91, %s92
    %p104 = scmp.eq.s32.totalorder %s19, 1
    %p105 = por %p103, %p104
    %p107 = scmp.ne.s32.totalorder %s92, %s106
    %p108 = scmp.eq.s32.totalorder %s19, 0
    %p109 = por %p107, %p108
    %s111 = sadd.s32 %s110, 1
    %p114 = scmp.eq.s32.totalorder %s13, 1
    %p115 = scmp.ne.s32.totalorder %s110, %s112
    %p116 = scmp.eq.s32.totalorder %s13, 0
    %p117 = por %p115, %p116
    %p118 = scmp.ne.s32.totalorder %s110, %s112
    %p119 = scmp.eq.s32.totalorder %s18, 1
    %p120 = por %p118, %p119
    %p121 = scmp.ne.s32.totalorder %s112, %s113
    %p122 = scmp.eq.s32.totalorder %s18, 0
    %p123 = por %p121, %p122
    %p124 = scmp.ne.s32.totalorder %s112, %s113
    %p125 = scmp.eq.s32.totalorder %s19, 1
    %p126 = por %p124, %p125
    %p128 = scmp.ne.s32.totalorder %s113, %s127
    %p129 = scmp.eq.s32.totalorder %s19, 0
    %p130 = por %p128, %p129
    %s132 = sadd.s32 %s131, 1
    %p135 = scmp.eq.s32.totalorder %s13, 1
    %p136 = scmp.ne.s32.totalorder %s131, %s133
    %p137 = scmp.eq.s32.totalorder %s13, 0
    %p138 = por %p136, %p137
    %p139 = scmp.ne.s32.totalorder %s131, %s133
    %p140 = scmp.eq.s32.totalorder %s18, 1
    %p141 = por %p139, %p140
    %p142 = scmp.ne.s32.totalorder %s133, %s134
    %p143 = scmp.eq.s32.totalorder %s18, 0
    %p144 = por %p142, %p143
    %p145 = scmp.ne.s32.totalorder %s133, %s134
    %p146 = scmp.eq.s32.totalorder %s19, 1
    %p147 = por %p145, %p146
    %p149 = scmp.ne.s32.totalorder %s134, %s148
    %p150 = scmp.eq.s32.totalorder %s19, 0
    %p151 = por %p149, %p150
    %s153 = sadd.s32 %s152, 1
    %p156 = scmp.eq.s32.totalorder %s13, 1
    %p157 = scmp.ne.s32.totalorder %s152, %s154
    %p158 = scmp.eq.s32.totalorder %s13, 0
    %p159 = por %p157, %p158
    %p160 = scmp.ne.s32.totalorder %s152, %s154
    %p161 = scmp.eq.s32.totalorder %s18, 1
    %p162 = por %p160, %p161
    %p163 = scmp.ne.s32.totalorder %s154, %s155
    %p164 = scmp.eq.s32.totalorder %s18, 0
    %p165 = por %p163, %p164
    %p166 = scmp.ne.s32.totalorder %s154, %s155
    %p167 = scmp.eq.s32.totalorder %s19, 1
    %p168 = por %p166, %p167
    %p170 = scmp.ne.s32.totalorder %s155, %s169
    %p171 = scmp.eq.s32.totalorder %s19, 0
    %p172 = por %p170, %p171
    %s173 = ssub.s32 %s13, %s20
    %p174 = scmp.eq.s32.totalorder %s173, 0
    %s176 = sadd.s32 %s175, 1
    %s177 = scalar_select %p174, %s175, %s176
    %p180 = pneg %p174
    %p181 = scmp.eq.s32.totalorder %s13, 1
    %p182 = por %p180, %p181
    %p183 = scmp.ne.s32.totalorder %s175, %s178
    %p184 = scmp.eq.s32.totalorder %s13, 0
    %p185 = por %p183, %p184
    %p186 = scmp.ne.s32.totalorder %s175, %s178
    %p187 = scmp.eq.s32.totalorder %s18, 1
    %p188 = por %p186, %p187
    %p189 = scmp.ne.s32.totalorder %s178, %s179
    %p190 = scmp.eq.s32.totalorder %s18, 0
    %p191 = por %p189, %p190
    %p192 = scmp.ne.s32.totalorder %s178, %s179
    %p193 = scmp.eq.s32.totalorder %s19, 1
    %p194 = por %p192, %p193
    %p196 = scmp.ne.s32.totalorder %s179, %s195
    %p197 = scmp.eq.s32.totalorder %s19, 0
    %p198 = por %p196, %p197
    %p199 = scmp.le.s32.totalorder 1, %s13
    %p200 = scmp.lt.s32.totalorder %s13, 3
    %p201 = pnand %p199, %p200
    %p202 = pneg %p201
    // Predicated region
    $region9: #{mlp_forward.1} parent=5 // pred_check
      _
    $region10: #{mlp_forward.1} parent=5 // pred_check_branch
      %204 = sbr.rel (%p201) target = $region12
    $region11: #{mlp_forward.1} parent=5 // pred_region
      %s205 = ssub.s32 %s13, 1
      // Predicated region
      $region13: #{mlp_forward.1} parent=11 // pred_check
        %p206 = pneg %p60
      $region14: #{mlp_forward.1} parent=11 // pred_check_branch
        %208 = sbr.rel (%p206) target = $region16
      $region15: #{mlp_forward.1} parent=11 // pred_region
        _
      $region16: #{mlp_forward.1} parent=11 // pred_fallthru
        _
      // Predicated region
      $region17: #{mlp_forward.1} parent=11 // pred_check
        %p209 = pneg %p81
      $region18: #{mlp_forward.1} parent=11 // pred_check_branch
        %211 = sbr.rel (%p209) target = $region20
      $region19: #{mlp_forward.1} parent=11 // pred_region
        _
      $region20: #{mlp_forward.1} parent=11 // pred_fallthru
        _
      // Predicated region
      $region21: #{mlp_forward.1} parent=11 // pred_check
        %p212 = pneg %p102
      $region22: #{mlp_forward.1} parent=11 // pred_check_branch
        %214 = sbr.rel (%p212) target = $region24
      $region23: #{mlp_forward.1} parent=11 // pred_region
        _
      $region24: #{mlp_forward.1} parent=11 // pred_fallthru
        _
      // Predicated region
      $region25: #{mlp_forward.1} parent=11 // pred_check
        %p215 = pneg %p123
      $region26: #{mlp_forward.1} parent=11 // pred_check_branch
        %217 = sbr.rel (%p215) target = $region28
      $region27: #{mlp_forward.1} parent=11 // pred_region
        _
      $region28: #{mlp_forward.1} parent=11 // pred_fallthru
        _
      // Predicated region
      $region29: #{mlp_forward.1} parent=11 // pred_check
        %p218 = pneg %p144
      $region30: #{mlp_forward.1} parent=11 // pred_check_branch
        %220 = sbr.rel (%p218) target = $region32
      $region31: #{mlp_forward.1} parent=11 // pred_region
        _
      $region32: #{mlp_forward.1} parent=11 // pred_fallthru
        _
      // Predicated region
      $region33: #{mlp_forward.1} parent=11 // pred_check
        %p221 = pneg %p165
      $region34: #{mlp_forward.1} parent=11 // pred_check_branch
        %223 = sbr.rel (%p221) target = $region36
      $region35: #{mlp_forward.1} parent=11 // pred_region
        _
      $region36: #{mlp_forward.1} parent=11 // pred_fallthru
        _
    $region12: #{mlp_forward.1} parent=5 // pred_fallthru
      _
    %p224 = scmp.lt.s32.totalorder %s13, 2
    // Predicated region
    $region37: #{mlp_forward.1} parent=5 // pred_check
      %p225 = pneg %p224
    $region38: #{mlp_forward.1} parent=5 // pred_check_branch
      %227 = sbr.rel (%p225) target = $region40
    $region39: #{mlp_forward.1} parent=5 // pred_region
      // Predicated region
      $region41: #{mlp_forward.1} parent=39 // pred_check
        %p228 = pneg %p33
      $region42: #{mlp_forward.1} parent=39 // pred_check_branch
        %230 = sbr.rel (%p228) target = $region44
      $region43: #{mlp_forward.1} parent=39 // pred_region
        %s231 = smul.u32 32, %s13
        %p232 = scmp.lt.s32.totalorder %s231, 63
        %s233 = scalar_select %p232, %s231, 63
        %s234 = smul.addr %s233, 8
        %s235 = scalar_lea.vmem %s0, %s234
        %s236 = smul.u32 32, %s13
      $region44: #{mlp_forward.1} parent=39 // pred_fallthru
        _
    $region40: #{mlp_forward.1} parent=5 // pred_fallthru
      _
    %p237 = scmp.le.s32.totalorder 1, %s13
    %p238 = scmp.lt.s32.totalorder %s13, 3
    %p239 = pnand %p237, %p238
    %p240 = pneg %p239
    // Predicated region
    $region45: #{mlp_forward.1} parent=5 // pred_check
      _
    $region46: #{mlp_forward.1} parent=5 // pred_check_branch
      %242 = sbr.rel (%p239) target = $region48
    $region47: #{mlp_forward.1} parent=5 // pred_region
      %s243 = ssub.s32 %s13, 1
      %s244 = smul.u32 32, %s18
      %p245 = scmp.lt.s32.totalorder %s244, 63
      %s246 = scalar_select %p245, %s244, 63
      %s247 = smul.addr %s246, 8
      %s248 = scalar_lea.vmem %s0, %s247
      %p249 = pneg %p39
      %p250 = pneg %p36
      %p251 = pneg %p60
      %p252 = pneg %p57
      %p253 = pneg %p81
      %p254 = pneg %p78
      %p255 = pneg %p102
      %p256 = pneg %p99
      %p257 = pneg %p123
      %p258 = pneg %p120
      %p259 = pneg %p144
      %p260 = pneg %p141
      %p261 = pneg %p165
      %p262 = pneg %p162
      %p263 = pneg %p191
      %p264 = pneg %p188
      %s265 = smul.u32 32, %s18
      %p266 = scmp.lt.s32.totalorder %s265, 63
      %s267 = scalar_select %p266, %s265, 63
      %s268 = smul.addr %s267, 8
      %s269 = scalar_lea.vmem %s7, %s268
      %s270 = smul.u32 32, %s18
      %p271 = scmp.lt.s32.totalorder %s270, 63
      %s272 = scalar_select %p271, %s270, 63
      %s273 = smul.addr %s272, 8
      %s274 = scalar_lea.vmem %s0, %s273
      %s275 = smul.u32 32, %s18
      %s276 = smul.u32 32, %s18
      %p277 = scmp.lt.s32.totalorder %s276, 63
      %s278 = scalar_select %p277, %s276, 63
      %s279 = smul.addr %s278, 8
      %s280 = scalar_lea.vmem %s7, %s279
      %s281 = smul.u32 32, %s18
      %v283 = vld [vmem:[%s274] sm:$0xff]
      %v284 = vld [vmem:[%s274 + $0x8] sm:$0xff]
      %v285 = vld [vmem:[%s274 + $0x10] sm:$0xff]
      %v286 = vld [vmem:[%s274 + $0x18] sm:$0xff]
      %v287 = vld [vmem:[%s274 + $0x20] sm:$0xff]
      %v288 = vld [vmem:[%s274 + $0x28] sm:$0xff]
      %v289 = vld [vmem:[%s274 + $0x30] sm:$0xff]
      %v290 = vld [vmem:[%s274 + $0x38] sm:$0xff]
      %v291 = vld [vmem:[%s274 + $0x40] sm:$0xff]
      %v292 = vld [vmem:[%s274 + $0x48] sm:$0xff]
      %v293 = vld [vmem:[%s274 + $0x50] sm:$0xff]
      %v294 = vld [vmem:[%s274 + $0x58] sm:$0xff]
      %v295 = vld [vmem:[%s274 + $0x60] sm:$0xff]
      %v296 = vld [vmem:[%s274 + $0x68] sm:$0xff]
      %v297 = vld [vmem:[%s274 + $0x70] sm:$0xff]
      %v298 = vld [vmem:[%s274 + $0x78] sm:$0xff]
      %v299 = vld [vmem:[%s274 + $0x80] sm:$0xff]
      %v300 = vld [vmem:[%s274 + $0x88] sm:$0xff]
      %v301 = vld [vmem:[%s274 + $0x90] sm:$0xff]
      %v302 = vld [vmem:[%s274 + $0x98] sm:$0xff]
      %v303 = vld [vmem:[%s274 + $0xa0] sm:$0xff]
      %v304 = vld [vmem:[%s274 + $0xa8] sm:$0xff]
      %v305 = vld [vmem:[%s274 + $0xb0] sm:$0xff]
      %v306 = vld [vmem:[%s274 + $0xb8] sm:$0xff]
      %v307 = vld [vmem:[%s274 + $0xc0] sm:$0xff]
      %v308 = vld [vmem:[%s274 + $0xc8] sm:$0xff]
      %v309 = vld [vmem:[%s274 + $0xd0] sm:$0xff]
      %v310 = vld [vmem:[%s274 + $0xd8] sm:$0xff]
      %v311 = vld [vmem:[%s274 + $0xe0] sm:$0xff]
      %v312 = vld [vmem:[%s274 + $0xe8] sm:$0xff]
      %v313 = vld [vmem:[%s274 + $0xf0] sm:$0xff]
      %v314 = vld [vmem:[%s274 + $0xf8] sm:$0xff]
      %v315 = vpack.c.bf16 %v284, %v283
      %v316 = vpack.c.bf16 %v286, %v285
      %v317 = vpack.c.bf16 %v288, %v287
      %v318 = vpack.c.bf16 %v290, %v289
      %v319 = vpack.c.bf16 %v292, %v291
      %v320 = vpack.c.bf16 %v294, %v293
      %v321 = vpack.c.bf16 %v296, %v295
      %v322 = vpack.c.bf16 %v298, %v297
      %v323 = vpack.c.bf16 %v300, %v299
      %v324 = vpack.c.bf16 %v302, %v301
      %v325 = vpack.c.bf16 %v304, %v303
      %v326 = vpack.c.bf16 %v306, %v305
      %v327 = vpack.c.bf16 %v308, %v307
      %v328 = vpack.c.bf16 %v310, %v309
      %v329 = vpack.c.bf16 %v312, %v311
      %v330 = vpack.c.bf16 %v314, %v313
      %v331 = vld [vmem:[%s1] sm:$0xf]
      %v332 = vld [vmem:[%s1 + $0x4] sm:$0xf]
      %v333 = vld [vmem:[%s1 + $0x8] sm:$0xf]
      %v334 = vld [vmem:[%s1 + $0xc] sm:$0xf]
      %v335 = vld [vmem:[%s2] sm:$0x1]
      %v337 = vperm.slane %v335, 0
      %v343 = vunpack.c.l.b16 %v331
      %v344 = vunpack.c.l.b16 %v332
      %v345 = vunpack.c.l.b16 %v333
      %v346 = vunpack.c.l.b16 %v334
      %v347 = vpack.c.b16 %v344, %v343
      %v348 = vpack.c.b16 %v346, %v345
      %vm351 = vcmask 261120
      %v353 = vsel %vm351, %v315, 0
      %v356 = vsel %vm351, %v316, 0
      %v359 = vsel %vm351, %v317, 0
      %v362 = vsel %vm351, %v318, 0
      %v365 = vsel %vm351, %v319, 0
      %v368 = vsel %vm351, %v320, 0
      %v371 = vsel %vm351, %v321, 0
      %v374 = vsel %vm351, %v322, 0
      %v377 = vsel %vm351, %v323, 0
      %v380 = vsel %vm351, %v324, 0
      %v383 = vsel %vm351, %v325, 0
      %v386 = vsel %vm351, %v326, 0
      %v389 = vsel %vm351, %v327, 0
      %v392 = vsel %vm351, %v328, 0
      %v395 = vsel %vm351, %v329, 0
      %v398 = vsel %vm351, %v330, 0
      %400 = vmatpush.bf16.msra.mxu0 0
      %401 = vmatpush.bf16.msra.mxu0 0
      %402 = vmatpush.bf16.msra.mxu0 0
      %403 = vmatpush.bf16.msra.mxu0 0
      %404 = vmatpush.bf16.msra.mxu0 0
      %405 = vmatpush.bf16.msra.mxu0 0
      %406 = vmatpush.bf16.msra.mxu0 %v348
      %407 = vmatpush.bf16.msra.mxu0 %v347
      %408 = vmatmul.bf16.gmra.mxu0 %v353
      %v409 = vpop.f32.mrf.mxu0
      %v410 = vadd.f32 %v337, %v409
      %v411 = vpop.f32.mrf.mxu0
      %v412 = vadd.f32 %v337, %v411
      %413 = vmatmul.bf16.gmra.mxu0 %v356
      %v414 = vpop.f32.mrf.mxu0
      %v415 = vadd.f32 %v337, %v414
      %v416 = vpop.f32.mrf.mxu0
      %v417 = vadd.f32 %v337, %v416
      %418 = vmatmul.bf16.gmra.mxu0 %v359
      %v419 = vpop.f32.mrf.mxu0
      %v420 = vadd.f32 %v337, %v419
      %v421 = vpop.f32.mrf.mxu0
      %v422 = vadd.f32 %v337, %v421
      %423 = vmatmul.bf16.gmra.mxu0 %v362
      %v424 = vpop.f32.mrf.mxu0
      %v425 = vadd.f32 %v337, %v424
      %v426 = vpop.f32.mrf.mxu0
      %v427 = vadd.f32 %v337, %v426
      %428 = vmatmul.bf16.gmra.mxu0 %v365
      %v429 = vpop.f32.mrf.mxu0
      %v430 = vadd.f32 %v337, %v429
      %v431 = vpop.f32.mrf.mxu0
      %v432 = vadd.f32 %v337, %v431
      %433 = vmatmul.bf16.gmra.mxu0 %v368
      %v434 = vpop.f32.mrf.mxu0
      %v435 = vadd.f32 %v337, %v434
      %v436 = vpop.f32.mrf.mxu0
      %v437 = vadd.f32 %v337, %v436
      %438 = vmatmul.bf16.gmra.mxu0 %v371
      %v439 = vpop.f32.mrf.mxu0
      %v440 = vadd.f32 %v337, %v439
      %v441 = vpop.f32.mrf.mxu0
      %v442 = vadd.f32 %v337, %v441
      %443 = vmatmul.bf16.gmra.mxu0 %v374
      %v444 = vpop.f32.mrf.mxu0
      %v445 = vadd.f32 %v337, %v444
      %v446 = vpop.f32.mrf.mxu0
      %v447 = vadd.f32 %v337, %v446
      %448 = vmatmul.bf16.gmra.mxu0 %v377
      %v449 = vpop.f32.mrf.mxu0
      %v450 = vadd.f32 %v337, %v449
      %v451 = vpop.f32.mrf.mxu0
      %v452 = vadd.f32 %v337, %v451
      %453 = vmatmul.bf16.gmra.mxu0 %v380
      %v454 = vpop.f32.mrf.mxu0
      %v455 = vadd.f32 %v337, %v454
      %v456 = vpop.f32.mrf.mxu0
      %v457 = vadd.f32 %v337, %v456
      %458 = vmatmul.bf16.gmra.mxu0 %v383
      %v459 = vpop.f32.mrf.mxu0
      %v460 = vadd.f32 %v337, %v459
      %v461 = vpop.f32.mrf.mxu0
      %v462 = vadd.f32 %v337, %v461
      %463 = vmatmul.bf16.gmra.mxu0 %v386
      %v464 = vpop.f32.mrf.mxu0
      %v465 = vadd.f32 %v337, %v464
      %v466 = vpop.f32.mrf.mxu0
      %v467 = vadd.f32 %v337, %v466
      %468 = vmatmul.bf16.gmra.mxu0 %v389
      %v469 = vpop.f32.mrf.mxu0
      %v470 = vadd.f32 %v337, %v469
      %v471 = vpop.f32.mrf.mxu0
      %v472 = vadd.f32 %v337, %v471
      %473 = vmatmul.bf16.gmra.mxu0 %v392
      %v474 = vpop.f32.mrf.mxu0
      %v475 = vadd.f32 %v337, %v474
      %v476 = vpop.f32.mrf.mxu0
      %v477 = vadd.f32 %v337, %v476
      %478 = vmatmul.bf16.gmra.mxu0 %v395
      %v479 = vpop.f32.mrf.mxu0
      %v480 = vadd.f32 %v337, %v479
      %v481 = vpop.f32.mrf.mxu0
      %v482 = vadd.f32 %v337, %v481
      %483 = vmatmul.bf16.gmra.mxu0 %v398
      %v484 = vpop.f32.mrf.mxu0
      %v485 = vadd.f32 %v337, %v484
      %v486 = vpop.f32.mrf.mxu0
      %v487 = vadd.f32 %v337, %v486
      %488 = vdwg.mxu0
      %v489 = vmax.f32 %v410, 0.0
      %v490 = vmax.f32 %v412, 0.0
      %v491 = vmax.f32 %v415, 0.0
      %v492 = vmax.f32 %v417, 0.0
      %v493 = vmax.f32 %v420, 0.0
      %v494 = vmax.f32 %v422, 0.0
      %v495 = vmax.f32 %v425, 0.0
      %v496 = vmax.f32 %v427, 0.0
      %v497 = vmax.f32 %v430, 0.0
      %v498 = vmax.f32 %v432, 0.0
      %v499 = vmax.f32 %v435, 0.0
      %v500 = vmax.f32 %v437, 0.0
      %v501 = vmax.f32 %v440, 0.0
      %v502 = vmax.f32 %v442, 0.0
      %v503 = vmax.f32 %v445, 0.0
      %v504 = vmax.f32 %v447, 0.0
      %v505 = vmax.f32 %v450, 0.0
      %v506 = vmax.f32 %v452, 0.0
      %v507 = vmax.f32 %v455, 0.0
      %v508 = vmax.f32 %v457, 0.0
      %v509 = vmax.f32 %v460, 0.0
      %v510 = vmax.f32 %v462, 0.0
      %v511 = vmax.f32 %v465, 0.0
      %v512 = vmax.f32 %v467, 0.0
      %v513 = vmax.f32 %v470, 0.0
      %v514 = vmax.f32 %v472, 0.0
      %v515 = vmax.f32 %v475, 0.0
      %v516 = vmax.f32 %v477, 0.0
      %v517 = vmax.f32 %v480, 0.0
      %v518 = vmax.f32 %v482, 0.0
      %v519 = vmax.f32 %v485, 0.0
      %v520 = vmax.f32 %v487, 0.0
      %v521 = vpack.c.bf16 %v490, %v489
      %v522 = vpack.c.bf16 %v492, %v491
      %v523 = vpack.c.bf16 %v494, %v493
      %v524 = vpack.c.bf16 %v496, %v495
      %v525 = vpack.c.bf16 %v498, %v497
      %v526 = vpack.c.bf16 %v500, %v499
      %v527 = vpack.c.bf16 %v502, %v501
      %v528 = vpack.c.bf16 %v504, %v503
      %v529 = vpack.c.bf16 %v506, %v505
      %v530 = vpack.c.bf16 %v508, %v507
      %v531 = vpack.c.bf16 %v510, %v509
      %v532 = vpack.c.bf16 %v512, %v511
      %v533 = vpack.c.bf16 %v514, %v513
      %v534 = vpack.c.bf16 %v516, %v515
      %v535 = vpack.c.bf16 %v518, %v517
      %v536 = vpack.c.bf16 %v520, %v519
      %v537 = vld [vmem:[%s3] sm:$0xf]
      %v538 = vld [vmem:[%s3 + $0x4] sm:$0xf]
      %v539 = vld [vmem:[%s3 + $0x8] sm:$0xf]
      %v540 = vld [vmem:[%s3 + $0xc] sm:$0xf]
      %v541 = vld [vmem:[%s3 + $0x10] sm:$0xf]
      %v542 = vld [vmem:[%s3 + $0x14] sm:$0xf]
      %v543 = vld [vmem:[%s3 + $0x18] sm:$0xf]
      %v544 = vld [vmem:[%s3 + $0x1c] sm:$0xf]
      %v545 = vld [vmem:[%s3 + $0x20] sm:$0xf]
      %v546 = vld [vmem:[%s3 + $0x24] sm:$0xf]
      %v547 = vld [vmem:[%s3 + $0x28] sm:$0xf]
      %v548 = vld [vmem:[%s3 + $0x2c] sm:$0xf]
      %v549 = vld [vmem:[%s3 + $0x30] sm:$0xf]
      %v550 = vld [vmem:[%s3 + $0x34] sm:$0xf]
      %v551 = vld [vmem:[%s3 + $0x38] sm:$0xf]
      %v552 = vld [vmem:[%s3 + $0x3c] sm:$0xf]
      %v553 = vld [vmem:[%s4] sm:$0x1]
      %v555 = vperm.slane %v553, 0
      %v573 = vunpack.c.l.b16 %v537
      %v574 = vunpack.c.l.b16 %v538
      %v575 = vunpack.c.l.b16 %v539
      %v576 = vunpack.c.l.b16 %v540
      %v577 = vunpack.c.l.b16 %v541
      %v578 = vunpack.c.l.b16 %v542
      %v579 = vunpack.c.l.b16 %v543
      %v580 = vunpack.c.l.b16 %v544
      %v581 = vunpack.c.l.b16 %v545
      %v582 = vunpack.c.l.b16 %v546
      %v583 = vunpack.c.l.b16 %v547
      %v584 = vunpack.c.l.b16 %v548
      %v585 = vunpack.c.l.b16 %v549
      %v586 = vunpack.c.l.b16 %v550
      %v587 = vunpack.c.l.b16 %v551
      %v588 = vunpack.c.l.b16 %v552
      %v589 = vpack.c.b16 %v574, %v573
      %v590 = vpack.c.b16 %v576, %v575
      %v591 = vpack.c.b16 %v578, %v577
      %v592 = vpack.c.b16 %v580, %v579
      %v593 = vpack.c.b16 %v582, %v581
      %v594 = vpack.c.b16 %v584, %v583
      %v595 = vpack.c.b16 %v586, %v585
      %v596 = vpack.c.b16 %v588, %v587
      %605 = vmatpush.bf16.msra.mxu0 %v596
      %606 = vmatpush.bf16.msra.mxu0 %v595
      %607 = vmatpush.bf16.msra.mxu0 %v594
      %608 = vmatpush.bf16.msra.mxu0 %v593
      %609 = vmatpush.bf16.msra.mxu0 %v592
      %610 = vmatpush.bf16.msra.mxu0 %v591
      %611 = vmatpush.bf16.msra.mxu0 %v590
      %612 = vmatpush.bf16.msra.mxu0 %v589
      %613 = vmatmul.bf16.gmra.mxu0 %v521
      %v614 = vpop.f32.mrf.mxu0
      %v615 = vadd.f32 %v555, %v614
      %v616 = vpop.f32.mrf.mxu0
      %v617 = vadd.f32 %v555, %v616
      %618 = vmatmul.bf16.gmra.mxu0 %v522
      %v619 = vpop.f32.mrf.mxu0
      %v620 = vadd.f32 %v555, %v619
      %v621 = vpop.f32.mrf.mxu0
      %v622 = vadd.f32 %v555, %v621
      %623 = vmatmul.bf16.gmra.mxu0 %v523
      %v624 = vpop.f32.mrf.mxu0
      %v625 = vadd.f32 %v555, %v624
      %v626 = vpop.f32.mrf.mxu0
      %v627 = vadd.f32 %v555, %v626
      %628 = vmatmul.bf16.gmra.mxu0 %v524
      %v629 = vpop.f32.mrf.mxu0
      %v630 = vadd.f32 %v555, %v629
      %v631 = vpop.f32.mrf.mxu0
      %v632 = vadd.f32 %v555, %v631
      %633 = vmatmul.bf16.gmra.mxu0 %v525
      %v634 = vpop.f32.mrf.mxu0
      %v635 = vadd.f32 %v555, %v634
      %v636 = vpop.f32.mrf.mxu0
      %v637 = vadd.f32 %v555, %v636
      %638 = vmatmul.bf16.gmra.mxu0 %v526
      %v639 = vpop.f32.mrf.mxu0
      %v640 = vadd.f32 %v555, %v639
      %v641 = vpop.f32.mrf.mxu0
      %v642 = vadd.f32 %v555, %v641
      %643 = vmatmul.bf16.gmra.mxu0 %v527
      %v644 = vpop.f32.mrf.mxu0
      %v645 = vadd.f32 %v555, %v644
      %v646 = vpop.f32.mrf.mxu0
      %v647 = vadd.f32 %v555, %v646
      %648 = vmatmul.bf16.gmra.mxu0 %v528
      %v649 = vpop.f32.mrf.mxu0
      %v650 = vadd.f32 %v555, %v649
      %v651 = vpop.f32.mrf.mxu0
      %v652 = vadd.f32 %v555, %v651
      %653 = vmatmul.bf16.gmra.mxu0 %v529
      %v654 = vpop.f32.mrf.mxu0
      %v655 = vadd.f32 %v555, %v654
      %v656 = vpop.f32.mrf.mxu0
      %v657 = vadd.f32 %v555, %v656
      %658 = vmatmul.bf16.gmra.mxu0 %v530
      %v659 = vpop.f32.mrf.mxu0
      %v660 = vadd.f32 %v555, %v659
      %v661 = vpop.f32.mrf.mxu0
      %v662 = vadd.f32 %v555, %v661
      %663 = vmatmul.bf16.gmra.mxu0 %v531
      %v664 = vpop.f32.mrf.mxu0
      %v665 = vadd.f32 %v555, %v664
      %v666 = vpop.f32.mrf.mxu0
      %v667 = vadd.f32 %v555, %v666
      %668 = vmatmul.bf16.gmra.mxu0 %v532
      %v669 = vpop.f32.mrf.mxu0
      %v670 = vadd.f32 %v555, %v669
      %v671 = vpop.f32.mrf.mxu0
      %v672 = vadd.f32 %v555, %v671
      %673 = vmatmul.bf16.gmra.mxu0 %v533
      %v674 = vpop.f32.mrf.mxu0
      %v675 = vadd.f32 %v555, %v674
      %v676 = vpop.f32.mrf.mxu0
      %v677 = vadd.f32 %v555, %v676
      %678 = vmatmul.bf16.gmra.mxu0 %v534
      %v679 = vpop.f32.mrf.mxu0
      %v680 = vadd.f32 %v555, %v679
      %v681 = vpop.f32.mrf.mxu0
      %v682 = vadd.f32 %v555, %v681
      %683 = vmatmul.bf16.gmra.mxu0 %v535
      %v684 = vpop.f32.mrf.mxu0
      %v685 = vadd.f32 %v555, %v684
      %v686 = vpop.f32.mrf.mxu0
      %v687 = vadd.f32 %v555, %v686
      %688 = vmatmul.bf16.gmra.mxu0 %v536
      %v689 = vpop.f32.mrf.mxu0
      %v690 = vadd.f32 %v555, %v689
      %v691 = vpop.f32.mrf.mxu0
      %v692 = vadd.f32 %v555, %v691
      %693 = vdwg.mxu0
      %v694 = vmax.f32 %v615, 0.0
      %v695 = vmax.f32 %v617, 0.0
      %v696 = vmax.f32 %v620, 0.0
      %v697 = vmax.f32 %v622, 0.0
      %v698 = vmax.f32 %v625, 0.0
      %v699 = vmax.f32 %v627, 0.0
      %v700 = vmax.f32 %v630, 0.0
      %v701 = vmax.f32 %v632, 0.0
      %v702 = vmax.f32 %v635, 0.0
      %v703 = vmax.f32 %v637, 0.0
      %v704 = vmax.f32 %v640, 0.0
      %v705 = vmax.f32 %v642, 0.0
      %v706 = vmax.f32 %v645, 0.0
      %v707 = vmax.f32 %v647, 0.0
      %v708 = vmax.f32 %v650, 0.0
      %v709 = vmax.f32 %v652, 0.0
      %v710 = vmax.f32 %v655, 0.0
      %v711 = vmax.f32 %v657, 0.0
      %v712 = vmax.f32 %v660, 0.0
      %v713 = vmax.f32 %v662, 0.0
      %v714 = vmax.f32 %v665, 0.0
      %v715 = vmax.f32 %v667, 0.0
      %v716 = vmax.f32 %v670, 0.0
      %v717 = vmax.f32 %v672, 0.0
      %v718 = vmax.f32 %v675, 0.0
      %v719 = vmax.f32 %v677, 0.0
      %v720 = vmax.f32 %v680, 0.0
      %v721 = vmax.f32 %v682, 0.0
      %v722 = vmax.f32 %v685, 0.0
      %v723 = vmax.f32 %v687, 0.0
      %v724 = vmax.f32 %v690, 0.0
      %v725 = vmax.f32 %v692, 0.0
      %v726 = vpack.c.bf16 %v695, %v694
      %v727 = vpack.c.bf16 %v697, %v696
      %v728 = vpack.c.bf16 %v699, %v698
      %v729 = vpack.c.bf16 %v701, %v700
      %v730 = vpack.c.bf16 %v703, %v702
      %v731 = vpack.c.bf16 %v705, %v704
      %v732 = vpack.c.bf16 %v707, %v706
      %v733 = vpack.c.bf16 %v709, %v708
      %v734 = vpack.c.bf16 %v711, %v710
      %v735 = vpack.c.bf16 %v713, %v712
      %v736 = vpack.c.bf16 %v715, %v714
      %v737 = vpack.c.bf16 %v717, %v716
      %v738 = vpack.c.bf16 %v719, %v718
      %v739 = vpack.c.bf16 %v721, %v720
      %v740 = vpack.c.bf16 %v723, %v722
      %v741 = vpack.c.bf16 %v725, %v724
      %v742 = vld [vmem:[%s5] sm:$0xf]
      %v743 = vld [vmem:[%s5 + $0x4] sm:$0xf]
      %v744 = vld [vmem:[%s5 + $0x8] sm:$0xf]
      %v745 = vld [vmem:[%s5 + $0xc] sm:$0xf]
      %v746 = vld [vmem:[%s5 + $0x10] sm:$0xf]
      %v747 = vld [vmem:[%s5 + $0x14] sm:$0xf]
      %v748 = vld [vmem:[%s5 + $0x18] sm:$0xf]
      %v749 = vld [vmem:[%s5 + $0x1c] sm:$0xf]
      %v750 = vld [vmem:[%s5 + $0x20] sm:$0xf]
      %v751 = vld [vmem:[%s5 + $0x24] sm:$0xf]
      %v752 = vld [vmem:[%s5 + $0x28] sm:$0xf]
      %v753 = vld [vmem:[%s5 + $0x2c] sm:$0xf]
      %v754 = vld [vmem:[%s5 + $0x30] sm:$0xf]
      %v755 = vld [vmem:[%s5 + $0x34] sm:$0xf]
      %v756 = vld [vmem:[%s5 + $0x38] sm:$0xf]
      %v757 = vld [vmem:[%s5 + $0x3c] sm:$0xf]
      %v758 = vld [vmem:[%s6] sm:$0x1]
      %v760 = vperm.slane %v758, 0
      %v778 = vunpack.c.l.b16 %v742
      %v779 = vunpack.c.l.b16 %v743
      %v780 = vunpack.c.l.b16 %v744
      %v781 = vunpack.c.l.b16 %v745
      %v782 = vunpack.c.l.b16 %v746
      %v783 = vunpack.c.l.b16 %v747
      %v784 = vunpack.c.l.b16 %v748
      %v785 = vunpack.c.l.b16 %v749
      %v786 = vunpack.c.l.b16 %v750
      %v787 = vunpack.c.l.b16 %v751
      %v788 = vunpack.c.l.b16 %v752
      %v789 = vunpack.c.l.b16 %v753
      %v790 = vunpack.c.l.b16 %v754
      %v791 = vunpack.c.l.b16 %v755
      %v792 = vunpack.c.l.b16 %v756
      %v793 = vunpack.c.l.b16 %v757
      %v794 = vpack.c.b16 %v779, %v778
      %v795 = vpack.c.b16 %v781, %v780
      %v796 = vpack.c.b16 %v783, %v782
      %v797 = vpack.c.b16 %v785, %v784
      %v798 = vpack.c.b16 %v787, %v786
      %v799 = vpack.c.b16 %v789, %v788
      %v800 = vpack.c.b16 %v791, %v790
      %v801 = vpack.c.b16 %v793, %v792
      %810 = vmatpush.bf16.msra.mxu0 %v801
      %811 = vmatpush.bf16.msra.mxu0 %v800
      %812 = vmatpush.bf16.msra.mxu0 %v799
      %813 = vmatpush.bf16.msra.mxu0 %v798
      %814 = vmatpush.bf16.msra.mxu0 %v797
      %815 = vmatpush.bf16.msra.mxu0 %v796
      %816 = vmatpush.bf16.msra.mxu0 %v795
      %817 = vmatpush.bf16.msra.mxu0 %v794
      %818 = vmatmul.bf16.gmra.mxu0 %v726
      %v819 = vpop.f32.mrf.mxu0
      %v820 = vadd.f32 %v760, %v819
      %v821 = vpop.f32.mrf.mxu0
      %v822 = vadd.f32 %v760, %v821
      %823 = vmatmul.bf16.gmra.mxu0 %v727
      %v824 = vpop.f32.mrf.mxu0
      %v825 = vadd.f32 %v760, %v824
      %v826 = vpop.f32.mrf.mxu0
      %v827 = vadd.f32 %v760, %v826
      %828 = vmatmul.bf16.gmra.mxu0 %v728
      %v829 = vpop.f32.mrf.mxu0
      %v830 = vadd.f32 %v760, %v829
      %v831 = vpop.f32.mrf.mxu0
      %v832 = vadd.f32 %v760, %v831
      %833 = vmatmul.bf16.gmra.mxu0 %v729
      %v834 = vpop.f32.mrf.mxu0
      %v835 = vadd.f32 %v760, %v834
      %v836 = vpop.f32.mrf.mxu0
      %v837 = vadd.f32 %v760, %v836
      %838 = vmatmul.bf16.gmra.mxu0 %v730
      %v839 = vpop.f32.mrf.mxu0
      %v840 = vadd.f32 %v760, %v839
      %v841 = vpop.f32.mrf.mxu0
      %v842 = vadd.f32 %v760, %v841
      %843 = vmatmul.bf16.gmra.mxu0 %v731
      %v844 = vpop.f32.mrf.mxu0
      %v845 = vadd.f32 %v760, %v844
      %v846 = vpop.f32.mrf.mxu0
      %v847 = vadd.f32 %v760, %v846
      %848 = vmatmul.bf16.gmra.mxu0 %v732
      %v849 = vpop.f32.mrf.mxu0
      %v850 = vadd.f32 %v760, %v849
      %v851 = vpop.f32.mrf.mxu0
      %v852 = vadd.f32 %v760, %v851
      %853 = vmatmul.bf16.gmra.mxu0 %v733
      %v854 = vpop.f32.mrf.mxu0
      %v855 = vadd.f32 %v760, %v854
      %v856 = vpop.f32.mrf.mxu0
      %v857 = vadd.f32 %v760, %v856
      %858 = vmatmul.bf16.gmra.mxu0 %v734
      %v859 = vpop.f32.mrf.mxu0
      %v860 = vadd.f32 %v760, %v859
      %v861 = vpop.f32.mrf.mxu0
      %v862 = vadd.f32 %v760, %v861
      %863 = vmatmul.bf16.gmra.mxu0 %v735
      %v864 = vpop.f32.mrf.mxu0
      %v865 = vadd.f32 %v760, %v864
      %v866 = vpop.f32.mrf.mxu0
      %v867 = vadd.f32 %v760, %v866
      %868 = vmatmul.bf16.gmra.mxu0 %v736
      %v869 = vpop.f32.mrf.mxu0
      %v870 = vadd.f32 %v760, %v869
      %v871 = vpop.f32.mrf.mxu0
      %v872 = vadd.f32 %v760, %v871
      %873 = vmatmul.bf16.gmra.mxu0 %v737
      %v874 = vpop.f32.mrf.mxu0
      %v875 = vadd.f32 %v760, %v874
      %v876 = vpop.f32.mrf.mxu0
      %v877 = vadd.f32 %v760, %v876
      %878 = vmatmul.bf16.gmra.mxu0 %v738
      %v879 = vpop.f32.mrf.mxu0
      %v880 = vadd.f32 %v760, %v879
      %v881 = vpop.f32.mrf.mxu0
      %v882 = vadd.f32 %v760, %v881
      %883 = vmatmul.bf16.gmra.mxu0 %v739
      %v884 = vpop.f32.mrf.mxu0
      %v885 = vadd.f32 %v760, %v884
      %v886 = vpop.f32.mrf.mxu0
      %v887 = vadd.f32 %v760, %v886
      %888 = vmatmul.bf16.gmra.mxu0 %v740
      %v889 = vpop.f32.mrf.mxu0
      %v890 = vadd.f32 %v760, %v889
      %v891 = vpop.f32.mrf.mxu0
      %v892 = vadd.f32 %v760, %v891
      %893 = vmatmul.bf16.gmra.mxu0 %v741
      %v894 = vpop.f32.mrf.mxu0
      %v895 = vadd.f32 %v760, %v894
      %v896 = vpop.f32.mrf.mxu0
      %v897 = vadd.f32 %v760, %v896
      %898 = vdwg.mxu0
      %vm899 = vcmask 130048
      %900 = vst.msk [vmem:[%s280] sm:$0xff] %vm899, %v820
      %901 = vst.msk [vmem:[%s280 + $0x8] sm:$0xff] %vm899, %v822
      %902 = vst.msk [vmem:[%s280 + $0x10] sm:$0xff] %vm899, %v825
      %903 = vst.msk [vmem:[%s280 + $0x18] sm:$0xff] %vm899, %v827
      %904 = vst.msk [vmem:[%s280 + $0x20] sm:$0xff] %vm899, %v830
      %905 = vst.msk [vmem:[%s280 + $0x28] sm:$0xff] %vm899, %v832
      %906 = vst.msk [vmem:[%s280 + $0x30] sm:$0xff] %vm899, %v835
      %907 = vst.msk [vmem:[%s280 + $0x38] sm:$0xff] %vm899, %v837
      %908 = vst.msk [vmem:[%s280 + $0x40] sm:$0xff] %vm899, %v840
      %909 = vst.msk [vmem:[%s280 + $0x48] sm:$0xff] %vm899, %v842
      %910 = vst.msk [vmem:[%s280 + $0x50] sm:$0xff] %vm899, %v845
      %911 = vst.msk [vmem:[%s280 + $0x58] sm:$0xff] %vm899, %v847
      %912 = vst.msk [vmem:[%s280 + $0x60] sm:$0xff] %vm899, %v850
      %913 = vst.msk [vmem:[%s280 + $0x68] sm:$0xff] %vm899, %v852
      %914 = vst.msk [vmem:[%s280 + $0x70] sm:$0xff] %vm899, %v855
      %915 = vst.msk [vmem:[%s280 + $0x78] sm:$0xff] %vm899, %v857
      %916 = vst.msk [vmem:[%s280 + $0x80] sm:$0xff] %vm899, %v860
      %917 = vst.msk [vmem:[%s280 + $0x88] sm:$0xff] %vm899, %v862
      %918 = vst.msk [vmem:[%s280 + $0x90] sm:$0xff] %vm899, %v865
      %919 = vst.msk [vmem:[%s280 + $0x98] sm:$0xff] %vm899, %v867
      %920 = vst.msk [vmem:[%s280 + $0xa0] sm:$0xff] %vm899, %v870
      %921 = vst.msk [vmem:[%s280 + $0xa8] sm:$0xff] %vm899, %v872
      %922 = vst.msk [vmem:[%s280 + $0xb0] sm:$0xff] %vm899, %v875
      %923 = vst.msk [vmem:[%s280 + $0xb8] sm:$0xff] %vm899, %v877
      %924 = vst.msk [vmem:[%s280 + $0xc0] sm:$0xff] %vm899, %v880
      %925 = vst.msk [vmem:[%s280 + $0xc8] sm:$0xff] %vm899, %v882
      %926 = vst.msk [vmem:[%s280 + $0xd0] sm:$0xff] %vm899, %v885
      %927 = vst.msk [vmem:[%s280 + $0xd8] sm:$0xff] %vm899, %v887
      %928 = vst.msk [vmem:[%s280 + $0xe0] sm:$0xff] %vm899, %v890
      %929 = vst.msk [vmem:[%s280 + $0xe8] sm:$0xff] %vm899, %v892
      %930 = vst.msk [vmem:[%s280 + $0xf0] sm:$0xff] %vm899, %v895
      %931 = vst.msk [vmem:[%s280 + $0xf8] sm:$0xff] %vm899, %v897
      %s932 = smul.u32 32, %s18
      %p933 = scmp.lt.s32.totalorder %s932, 63
      %s934 = scalar_select %p933, %s932, 63
      %s935 = smul.addr %s934, 8
      %s936 = scalar_lea.vmem %s7, %s935
      // Predicated region
      $region49: #{mlp_forward.1} parent=47 // pred_check
        %p937 = pneg %p188
      $region50: #{mlp_forward.1} parent=47 // pred_check_branch
        %939 = sbr.rel (%p937) target = $region52
      $region51: #{mlp_forward.1} parent=47 // pred_region
        %s940 = smul.u32 32, %s18
      $region52: #{mlp_forward.1} parent=47 // pred_fallthru
        _
    $region48: #{mlp_forward.1} parent=5 // pred_fallthru
      _
    %p941 = scmp.le.s32.totalorder 2, %s13
    // Predicated region
    $region53: #{mlp_forward.1} parent=5 // pred_check
      %p942 = pneg %p941
    $region54: #{mlp_forward.1} parent=5 // pred_check_branch
      %944 = sbr.rel (%p942) target = $region56
    $region55: #{mlp_forward.1} parent=5 // pred_region
      %s945 = ssub.s32 %s13, 2
      // Predicated region
      $region57: #{mlp_forward.1} parent=55 // pred_check
        %p946 = pneg %p194
      $region58: #{mlp_forward.1} parent=55 // pred_check_branch
        %948 = sbr.rel (%p946) target = $region60
      $region59: #{mlp_forward.1} parent=55 // pred_region
        %s949 = smul.u32 32, %s19
        %p950 = scmp.lt.s32.totalorder %s949, 63
        %s951 = scalar_select %p950, %s949, 63
        %s952 = smul.addr %s951, 8
        %s953 = scalar_lea.vmem %s7, %s952
      $region60: #{mlp_forward.1} parent=55 // pred_fallthru
        _
    $region56: #{mlp_forward.1} parent=5 // pred_fallthru
      _
  $region6: #{mlp_forward.1} parent=0 // loop_footer
    %s17 = sadd.s32 1, %s13
  $region7: #{mlp_forward.1} parent=0 // loop_footer_branch
    %12 = sbr.rel target = $region3
  $region8: #{mlp_forward.1} parent=0 // loop_exit
    _

</llo_original>
